<compile_context>
chip_gen: v5e
topology: v5e:2x2
jax: 0.10.0
libtpu: 0.0.40
codegen_flags: <defaults>
</compile_context>

<pallas_src>
import functools

import jax
import jax.numpy as jnp
from jax.experimental import pallas as pl
from jax.experimental.pallas import tpu as pltpu

EPS = 1e-5


def _round_up(x, m):
    return (x + m - 1) // m * m


# ---------------------------------------------------------------------------
# In-kernel helpers
# ---------------------------------------------------------------------------
def _border_masks(tm, L):
    # Tile width is a multiple of L, so local lane index j has j % L equal to
    # the position inside its sequence.  Masks kill taps that would cross a
    # sequence border (PyTorch zero-pads every sequence independently).
    j = jax.lax.broadcasted_iota(jnp.int32, (1, tm), 1)
    jl = j % L
    not_first = (jl != 0).astype(jnp.float32)          # kills the k=0 (left) tap
    not_last = (jl != (L - 1)).astype(jnp.float32)     # kills the k=2 (right) tap
    return not_first, not_last


def _conv3_taps(h, w_ref, not_first, not_last):
    # 3-tap "same" conv along lanes: shifted views via pltpu.roll (XLU slot,
    # no unaligned lane-slice relayout), then 3 small dots (no im2col concat).
    tm = h.shape[1]
    left = pltpu.roll(h, 1, axis=1) * not_first          # h[:, j-1], border-masked
    right = pltpu.roll(h, tm - 1, axis=1) * not_last     # h[:, j+1], border-masked
    y = jnp.dot(w_ref[1], h, preferred_element_type=jnp.float32)
    y = y + jnp.dot(w_ref[0], left, preferred_element_type=jnp.float32)
    y = y + jnp.dot(w_ref[2], right, preferred_element_type=jnp.float32)
    return y


# ---------------------------------------------------------------------------
# Kernels
# ---------------------------------------------------------------------------
def _stats1_kernel(x_ref, w1_ref, s_ref, q_ref, *, L):
    # Pass A: per-tile partial sum / sumsq of conv1(x).  Zero-padded fake
    # positions/channels produce conv1 == 0 (no bias), so no validity mask is
    # needed here.
    h = x_ref[...]
    nf, nl = _border_masks(h.shape[1], L)
    y1 = _conv3_taps(h, w1_ref, nf, nl)
    s_ref[...] = jnp.sum(y1, axis=1, keepdims=True)
    q_ref[...] = jnp.sum(y1 * y1, axis=1, keepdims=True)


def _conv_fused_kernel(x_ref, w1_ref, w2_ref, sc1_ref, sh1_ref,
                       y2_ref, s_ref, q_ref, *, L, m_real):
    # Pass B: conv1 -> BN1(scale/shift) -> ReLU -> conv2, plus per-tile partial
    # stats of conv2 output.
    tm = x_ref.shape[1]
    nf, nl = _border_masks(tm, L)
    y1 = _conv3_taps(x_ref[...], w1_ref, nf, nl)
    h1 = jnp.maximum(y1 * sc1_ref[...] + sh1_ref[...], 0.0)

    # Zero fake (lane-padding) positions so conv2 / BN2 stats only see real data.
    j = jax.lax.broadcasted_iota(jnp.int32, (1, tm), 1)
    valid = ((pl.program_id(0) * tm + j) < m_real).astype(jnp.float32)
    h1 = h1 * valid

    y2 = _conv3_taps(h1, w2_ref, nf, nl)
    y2_ref[...] = y2
    s_ref[...] = jnp.sum(y2, axis=1, keepdims=True)
    q_ref[...] = jnp.sum(y2 * y2, axis=1, keepdims=True)


def _bn_relu_kernel(y_ref, sc_ref, sh_ref, o_ref):
    # Pass C: BN2 (folded scale/shift) + ReLU epilogue, lane-dense store.
    o_ref[...] = jnp.maximum(y_ref[...] * sc_ref[...] + sh_ref[...], 0.0)


# ---------------------------------------------------------------------------
# Host-side glue
# ---------------------------------------------------------------------------
def _fold_bn(psum, psumsq, gamma_p, beta_p, count):
    # Reduce per-tile partials and fold BatchNorm (training-mode batch stats,
    # biased variance) into a per-channel scale/shift.
    # TODO(synk): switch to compensated / Welford stats if |mean| >> std at
    # production scales (E[x^2] - mean^2 cancellation).
    inv = 1.0 / float(count)
    mean = jnp.sum(psum[:, :, 0], axis=0) * inv
    ex2 = jnp.sum(psumsq[:, :, 0], axis=0) * inv
    var = ex2 - mean * mean
    scale = gamma_p * jax.lax.rsqrt(var + EPS)
    shift = beta_p - mean * scale
    return scale.reshape(-1, 1), shift.reshape(-1, 1)


def _compiler_params():
    # Generation-aware VMEM budget with ~25% headroom: ~96 MiB on v5e/v6e
    # (128 MiB physical), ~48 MiB on v7x (64 MiB physical).
    try:
        cap = pltpu.get_tpu_info().vmem_capacity_bytes
    except Exception:
        cap = 64 * 1024 * 1024
    return pltpu.CompilerParams(
        dimension_semantics=("parallel",),
        vmem_limit_bytes=int(cap) * 3 // 4,
    )


def double_conv(x_ncl, w1, g1, b1, w2, g2, b2, *, target_lanes=2048):
    """x_ncl: (N, Cin, L) f32 (PyTorch NCW).  w*: PyTorch layout (Cout, Cin, 3)."""
    N, Cin, L = x_ncl.shape
    Cout = w1.shape[0]
    Cin_p, Cout_p = _round_up(Cin, 8), _round_up(Cout, 8)
    M_real = N * L
    f32 = jnp.float32

    # Lane tiling: whole sequences per tile (multiple of L) so conv needs no
    # halo; aim for >=128-lane (ideally ~2K) tiles for unmasked stores.
    lanes_goal = min(target_lanes, _round_up(M_real, 128))
    spt = max(1, -(-lanes_goal // L))            # sequences per tile
    TM = spt * L
    N_pad = _round_up(N, spt)
    M_pad = N_pad * L
    T = M_pad // TM

    # Input: NCW -> channel-major (Cin_p, N_pad*L); channels on sublanes (padded
    # to 8), flattened batch*length lane-dense.
    # TODO(synk): for large, 128-multiple L keep (N, C, L) and grid over N to
    # avoid this transpose; negligible at these shapes.
    x2d = jnp.zeros((Cin_p, M_pad), f32)
    x2d = x2d.at[:Cin, :M_real].set(
        jnp.transpose(x_ncl, (1, 0, 2)).reshape(Cin, M_real).astype(f32))

    def pack_w(w, ci_p, co_p):
        co, ci, _ = w.shape
        wp = jnp.zeros((3, co_p, ci_p), f32)
        return wp.at[:, :co, :ci].set(jnp.transpose(w, (2, 0, 1)).astype(f32))

    def pad_vec(v, n_p, fill):
        return jnp.full((n_p,), fill, f32).at[: v.shape[0]].set(v.astype(f32))

    w1p = pack_w(w1, Cin_p, Cout_p)
    w2p = pack_w(w2, Cout_p, Cout_p)
    g1p, b1p = pad_vec(g1, Cout_p, 1.0), pad_vec(b1, Cout_p, 0.0)
    g2p, b2p = pad_vec(g2, Cout_p, 1.0), pad_vec(b2, Cout_p, 0.0)

    cparams = _compiler_params()
    stat_shape = jax.ShapeDtypeStruct((T, Cout_p, 1), f32)
    stat_spec = pl.BlockSpec((None, Cout_p, 1), lambda i: (i, 0, 0))
    w1_spec = pl.BlockSpec((3, Cout_p, Cin_p), lambda i: (0, 0, 0))    # resident
    w2_spec = pl.BlockSpec((3, Cout_p, Cout_p), lambda i: (0, 0, 0))   # resident
    col_spec = pl.BlockSpec((Cout_p, 1), lambda i: (0, 0))             # resident
    x_spec = pl.BlockSpec((Cin_p, TM), lambda i: (0, i))
    y_spec = pl.BlockSpec((Cout_p, TM), lambda i: (0, i))

    # Pass A: conv1 tile statistics.
    s1, q1 = pl.pallas_call(
        functools.partial(_stats1_kernel, L=L),
        grid=(T,),
        in_specs=[x_spec, w1_spec],
        out_specs=[stat_spec, stat_spec],
        out_shape=[stat_shape, stat_shape],
        compiler_params=cparams,
    )(x2d, w1p)
    scale1, shift1 = _fold_bn(s1, q1, g1p, b1p, M_real)

    # Pass B: conv1 -> BN1 -> ReLU -> conv2 (+ conv2 tile statistics).
    y2, s2, q2 = pl.pallas_call(
        functools.partial(_conv_fused_kernel, L=L, m_real=M_real),
        grid=(T,),
        in_specs=[x_spec, w1_spec, w2_spec, col_spec, col_spec],
        out_specs=[y_spec, stat_spec, stat_spec],
        out_shape=[jax.ShapeDtypeStruct((Cout_p, M_pad), f32), stat_shape, stat_shape],
        compiler_params=cparams,
    )(x2d, w1p, w2p, scale1, shift1)
    scale2, shift2 = _fold_bn(s2, q2, g2p, b2p, M_real)

    # Pass C: BN2 + ReLU epilogue.
    out2d = pl.pallas_call(
        _bn_relu_kernel,
        grid=(T,),
        in_specs=[y_spec, col_spec, col_spec],
        out_specs=y_spec,
        out_shape=jax.ShapeDtypeStruct((Cout_p, M_pad), f32),
        compiler_params=cparams,
    )(y2, scale2, shift2)

    out = out2d[:Cout, :M_real].reshape(Cout, N, L)
    return jnp.transpose(out, (1, 0, 2))


def double_conv_ref(x_ncl, w1, g1, b1, w2, g2, b2):
    """Pure-JAX reference (PyTorch semantics, BatchNorm in training mode)."""
    def conv1d(x, w):
        return jax.lax.conv_general_dilated(
            x, w, window_strides=(1,), padding=((1, 1),),
            dimension_numbers=('NCH', 'OIH', 'NCH'))

    def bn_relu(y, g, b):
        m = jnp.mean(y, axis=(0, 2), keepdims=True)
        v = jnp.mean((y - m) ** 2, axis=(0, 2), keepdims=True)
        yh = (y - m) / jnp.sqrt(v + EPS) * g.reshape(1, -1, 1) + b.reshape(1, -1, 1)
        return jnp.maximum(yh, 0.0)

    h = bn_relu(conv1d(x_ncl, w1), g1, b1)
    return bn_relu(conv1d(h, w2), g2, b2)


if __name__ == "__main__":
    feature_channel, output_channel = 4, 8
    N, L = 2, 16

    key = jax.random.PRNGKey(0)
    kx, kw1, kw2 = jax.random.split(key, 3)

    x = jax.random.normal(kx, (N, feature_channel, L), dtype=jnp.float32)
    # deterministic synthetic parameters (PyTorch layouts / defaults)
    w1 = 0.1 * jax.random.normal(kw1, (output_channel, feature_channel, 3), dtype=jnp.float32)
    w2 = 0.1 * jax.random.normal(kw2, (output_channel, output_channel, 3), dtype=jnp.float32)
    g1 = jnp.ones((output_channel,), jnp.float32)   # BatchNorm default weight
    b1 = jnp.zeros((output_channel,), jnp.float32)  # BatchNorm default bias
    g2 = jnp.ones((output_channel,), jnp.float32)
    b2 = jnp.zeros((output_channel,), jnp.float32)

    out = jax.block_until_ready(double_conv(x, w1, g1, b1, w2, g2, b2))

    ref = double_conv_ref(x, w1, g1, b1, w2, g2, b2)
    assert out.shape == (N, output_channel, L)
    max_err = float(jnp.max(jnp.abs(out - ref)))
    assert jnp.allclose(out, ref, atol=1e-4, rtol=1e-4), max_err

    print("KERNEL_OK")
</pallas_src>

<mosaic_0001>
module attributes {stable_mosaic.version = 11 : i64} {
  func.func @_stats1_kernel(%arg0: i32, %arg1: memref<8x128xf32, #tpu.memory_space<vmem>>, %arg2: memref<3x8x8xf32, #tpu.memory_space<vmem>>, %arg3: memref<1x8x1xf32, #tpu.memory_space<vmem>>, %arg4: memref<1x8x1xf32, #tpu.memory_space<vmem>>) attributes {dimension_semantics = [#tpu.dimension_semantics<parallel>], iteration_bounds = array<i64: 1>, scalar_prefetch = 0 : i64, scratch_operands = 0 : i64, tpu.core_type = #tpu.core_type<tc>, window_params = [{transform_indices = @transform_0, window_bounds = array<i64: 8, 128>}, {pipeline_mode = #tpu.pipeline_mode<synchronous>, transform_indices = @transform_1, window_bounds = array<i64: 3, 8, 8>}, {transform_indices = @transform_2, window_bounds = array<i64: 1, 8, 1>}, {transform_indices = @transform_3, window_bounds = array<i64: 1, 8, 1>}]} {
    %c0 = arith.constant 0 : index
    %c0_0 = arith.constant 0 : index
    %0 = vector.load %arg1[%c0, %c0_0] : memref<8x128xf32, #tpu.memory_space<vmem>>, vector<8x128xf32>
    %1 = tpu.iota {dimensions = array<i32: 1>} : vector<1x128xi32>
    %c16_i32 = arith.constant 16 : i32
    %c0_i32 = arith.constant 0 : i32
    %2 = arith.cmpi eq, %c16_i32, %c0_i32 : i32
    %c1_i32 = arith.constant 1 : i32
    %3 = arith.select %2, %c1_i32, %c16_i32 : i32
    %4 = vector.broadcast %3 : i32 to vector<1x128xi32>
    %5 = arith.remsi %1, %4 : vector<1x128xi32>
    %c0_i32_1 = arith.constant 0 : i32
    %6 = vector.broadcast %c0_i32_1 : i32 to vector<1x128xi32>
    %7 = arith.cmpi ne, %5, %6 : vector<1x128xi32>
    %c0_i32_2 = arith.constant 0 : i32
    %8 = vector.broadcast %c0_i32_2 : i32 to vector<1x128xi32>
    %9 = arith.cmpi slt, %5, %8 : vector<1x128xi32>
    %c0_i32_3 = arith.constant 0 : i32
    %10 = arith.cmpi slt, %3, %c0_i32_3 : i32
    %11 = vector.broadcast %10 : i1 to vector<1x128xi1>
    %12 = vector.broadcast %11 : vector<1x128xi1> to vector<1x128xi1>
    %13 = arith.xori %9, %12 : vector<1x128xi1>
    %14 = arith.andi %13, %7 : vector<1x128xi1>
    %15 = vector.broadcast %3 : i32 to vector<1x128xi32>
    %16 = arith.addi %5, %15 : vector<1x128xi32>
    %17 = arith.select %14, %16, %5 : vector<1x128xi1>, vector<1x128xi32>
    %c0_i32_4 = arith.constant 0 : i32
    %18 = vector.broadcast %c0_i32_4 : i32 to vector<1x128xi32>
    %19 = arith.cmpi ne, %17, %18 : vector<1x128xi32>
    %20 = arith.extui %19 : vector<1x128xi1> to vector<1x128xi32>
    %21 = arith.sitofp %20 : vector<1x128xi32> to vector<1x128xf32>
    %c15_i32 = arith.constant 15 : i32
    %22 = vector.broadcast %c15_i32 : i32 to vector<1x128xi32>
    %23 = arith.cmpi ne, %17, %22 : vector<1x128xi32>
    %24 = arith.extui %23 : vector<1x128xi1> to vector<1x128xi32>
    %25 = arith.sitofp %24 : vector<1x128xi32> to vector<1x128xf32>
    %c1_i32_5 = arith.constant 1 : i32
    %26 = tpu.dynamic_rotate %0 by %c1_i32_5 dim 1 : vector<8x128xf32>, i32 -> vector<8x128xf32>
    %27 = vector.broadcast %21 : vector<1x128xf32> to vector<8x128xf32>
    %28 = arith.mulf %26, %27 : vector<8x128xf32>
    %c127_i32 = arith.constant 127 : i32
    %29 = tpu.dynamic_rotate %0 by %c127_i32 dim 1 : vector<8x128xf32>, i32 -> vector<8x128xf32>
    %30 = vector.broadcast %25 : vector<1x128xf32> to vector<8x128xf32>
    %31 = arith.mulf %29, %30 : vector<8x128xf32>
    %c1 = arith.constant 1 : index
    %c0_6 = arith.constant 0 : index
    %c0_7 = arith.constant 0 : index
    %32 = vector.load %arg2[%c1, %c0_6, %c0_7] : memref<3x8x8xf32, #tpu.memory_space<vmem>>, vector<1x8x8xf32>
    %33 = vector.shape_cast %32 : vector<1x8x8xf32> to vector<8x8xf32>
    %cst = arith.constant dense<0.000000e+00> : vector<8x128xf32>
    %34 = tpu.matmul %33, %0, %cst {dimension_numbers = #tpu.dot_dimension_numbers<[1], [0], [0], [1], [0, 0, 1, 1], [], []>} : vector<8x8xf32>, vector<8x128xf32>, vector<8x128xf32> -> vector<8x128xf32>
    %c0_8 = arith.constant 0 : index
    %c0_9 = arith.constant 0 : index
    %c0_10 = arith.constant 0 : index
    %35 = vector.load %arg2[%c0_8, %c0_9, %c0_10] : memref<3x8x8xf32, #tpu.memory_space<vmem>>, vector<1x8x8xf32>
    %36 = vector.shape_cast %35 : vector<1x8x8xf32> to vector<8x8xf32>
    %cst_11 = arith.constant dense<0.000000e+00> : vector<8x128xf32>
    %37 = tpu.matmul %36, %28, %cst_11 {dimension_numbers = #tpu.dot_dimension_numbers<[1], [0], [0], [1], [0, 0, 1, 1], [], []>} : vector<8x8xf32>, vector<8x128xf32>, vector<8x128xf32> -> vector<8x128xf32>
    %38 = arith.addf %34, %37 : vector<8x128xf32>
    %c2 = arith.constant 2 : index
    %c0_12 = arith.constant 0 : index
    %c0_13 = arith.constant 0 : index
    %39 = vector.load %arg2[%c2, %c0_12, %c0_13] : memref<3x8x8xf32, #tpu.memory_space<vmem>>, vector<1x8x8xf32>
    %40 = vector.shape_cast %39 : vector<1x8x8xf32> to vector<8x8xf32>
    %cst_14 = arith.constant dense<0.000000e+00> : vector<8x128xf32>
    %41 = tpu.matmul %40, %31, %cst_14 {dimension_numbers = #tpu.dot_dimension_numbers<[1], [0], [0], [1], [0, 0, 1, 1], [], []>} : vector<8x8xf32>, vector<8x128xf32>, vector<8x128xf32> -> vector<8x128xf32>
    %42 = arith.addf %38, %41 : vector<8x128xf32>
    %cst_15 = arith.constant dense<0.000000e+00> : vector<8xf32>
    %43 = vector.multi_reduction <add>, %42, %cst_15 [1] : vector<8x128xf32> to vector<8xf32>
    %44 = vector.shape_cast %43 : vector<8xf32> to vector<8x1xf32>
    %c0_16 = arith.constant 0 : index
    %c0_17 = arith.constant 0 : index
    %c0_18 = arith.constant 0 : index
    %45 = vector.load %arg3[%c0_16, %c0_17, %c0_18] : memref<1x8x1xf32, #tpu.memory_space<vmem>>, vector<1x8x1xf32>
    %46 = vector.shape_cast %45 : vector<1x8x1xf32> to vector<8x1xf32>
    %47 = vector.shape_cast %44 : vector<8x1xf32> to vector<1x8x1xf32>
    tpu.vector_store %arg3[%c0_16, %c0_17, %c0_18], %47 {strides = array<i32>} : memref<1x8x1xf32, #tpu.memory_space<vmem>>, vector<1x8x1xf32>,
    %48 = arith.mulf %42, %42 : vector<8x128xf32>
    %cst_19 = arith.constant dense<0.000000e+00> : vector<8xf32>
    %49 = vector.multi_reduction <add>, %48, %cst_19 [1] : vector<8x128xf32> to vector<8xf32>
    %50 = vector.shape_cast %49 : vector<8xf32> to vector<8x1xf32>
    %c0_20 = arith.constant 0 : index
    %c0_21 = arith.constant 0 : index
    %c0_22 = arith.constant 0 : index
    %51 = vector.load %arg4[%c0_20, %c0_21, %c0_22] : memref<1x8x1xf32, #tpu.memory_space<vmem>>, vector<1x8x1xf32>
    %52 = vector.shape_cast %51 : vector<1x8x1xf32> to vector<8x1xf32>
    %53 = vector.shape_cast %50 : vector<8x1xf32> to vector<1x8x1xf32>
    tpu.vector_store %arg4[%c0_20, %c0_21, %c0_22], %53 {strides = array<i32>} : memref<1x8x1xf32, #tpu.memory_space<vmem>>, vector<1x8x1xf32>,
    return
  }
  func.func @transform_0(%arg0: i32) -> (i32, i32) {
    %c0_i32 = arith.constant 0 : i32
    %c0_i32_0 = arith.constant 0 : i32
    return %c0_i32, %arg0 : i32, i32
  }
  func.func @transform_1(%arg0: i32) -> (i32, i32, i32) {
    %c0_i32 = arith.constant 0 : i32
    %c0_i32_0 = arith.constant 0 : i32
    %c0_i32_1 = arith.constant 0 : i32
    %c0_i32_2 = arith.constant 0 : i32
    return %c0_i32, %c0_i32_0, %c0_i32_1 : i32, i32, i32
  }
  func.func @transform_2(%arg0: i32) -> (i32, i32, i32) {
    %c0_i32 = arith.constant 0 : i32
    %c0_i32_0 = arith.constant 0 : i32
    %c0_i32_1 = arith.constant 0 : i32
    return %arg0, %c0_i32, %c0_i32_0 : i32, i32, i32
  }
  func.func @transform_3(%arg0: i32) -> (i32, i32, i32) {
    %c0_i32 = arith.constant 0 : i32
    %c0_i32_0 = arith.constant 0 : i32
    %c0_i32_1 = arith.constant 0 : i32
    return %arg0, %c0_i32, %c0_i32_0 : i32, i32, i32
  }
}

</mosaic_0001>

<llo_original>
// kernel: tpu_custom_call.1
$region0: #{tpu_custom_call.1}
  #allocation0 [shape = 'u32[]', space=smem, size = 0x4, offset = 0x4, fixed_abs, tag = 'smem constant byte address 0x4 - core index']
  #allocation1 [shape = 'u32[72,128]{1,0:T(1,128)}', space=vmem, size = 0x9000, scoped, tag = 'internal scratch']
  %s0 = inlined_call_operand.hbm [shape: f32[8,128], index: 0, kind: input, shape index: {}]
  %s1 = inlined_call_operand.hbm [shape: f32[3,8,8], index: 1, kind: input, shape index: {}]
  %s2 = inlined_call_operand.vmem [shape: f32[1,8,1], index: 2, kind: output, shape index: {0}]
  %s3 = inlined_call_operand.vmem [shape: f32[1,8,1], index: 3, kind: output, shape index: {1}]
  %4 = xla_tuple %s2, %s3
  %s5 = sld [smem:[#allocation0]]
  $region34: #{tpu_custom_call.1} parent=0
    _
  %s7 = ssub.s32 1, %s5
  %s8 = scalar_select 0, %s7, %s5
  $region1: #{tpu_custom_call.1} parent=0
    #allocation2 [shape = 'u8[4096]{0}', space=vmem, size = 0x1000, scoped, tag = 'input window, operand 0, single buffered']
    #allocation3 [shape = 's32[1]{0}', space=sflag, size = 0x4, scoped, tag = 'scoped memory for tpu_custom_call.1']
    #allocation4 [shape = 'u8[12288]{0}', space=vmem, size = 0x3000, scoped, tag = 'input window, operand 1, single buffered']
    #allocation5 [shape = 's32[1]{0}', space=sflag, size = 0x4, scoped, tag = 'scoped memory for tpu_custom_call.1']
    %9 = vsyncpa [#allocation3], 0
    %10 = vsyncpa [#allocation5], 0
    // Predicated region
    $region2: #{tpu_custom_call.1} parent=1 // pred_check
      _
    $region3: #{tpu_custom_call.1} parent=1 // pred_check_branch
      %12 = sbr.rel (0) target = $region5
    $region4: #{tpu_custom_call.1} parent=1 // pred_region
      %14 = vsyncadd [#allocation3], 0
      %s16 = sshll.u32 %s0, 4
      %s17 = int_to_ptr.hbm [resolvable:$true] %s16
      %s18 = sshll.u32 [#allocation2], 4
      %s19 = int_to_ptr.vmem [resolvable:$true] %s18
      %21 = dma.hbm_to_vmem [thread:$0]  %s17, 128, %s19, [#allocation3]
    $region5: #{tpu_custom_call.1} parent=1 // pred_fallthru
      _
    // Predicated region
    $region6: #{tpu_custom_call.1} parent=1 // pred_check
      _
    $region7: #{tpu_custom_call.1} parent=1 // pred_check_branch
      %23 = sbr.rel (0) target = $region9
    $region8: #{tpu_custom_call.1} parent=1 // pred_region
      %25 = vsyncadd [#allocation5], 0
      %s26 = sshll.u32 %s1, 4
      %s27 = int_to_ptr.hbm [resolvable:$true] %s26
      %s28 = sshll.u32 [#allocation4], 4
      %s29 = int_to_ptr.vmem [resolvable:$true] %s28
      %34 = dma.hbm_to_vmem [thread:$0]  %s27, 384, %s29, [#allocation5], 128, 128, 8
    $region9: #{tpu_custom_call.1} parent=1 // pred_fallthru
      _
    // Predicated region
    $region10: #{tpu_custom_call.1} parent=1 // pred_check
      _
    $region11: #{tpu_custom_call.1} parent=1 // pred_check_branch
      %36 = sbr.rel (0) target = $region13
    $region12: #{tpu_custom_call.1} parent=1 // pred_region
      %38 = dma.done [#allocation3], 128
    $region13: #{tpu_custom_call.1} parent=1 // pred_fallthru
      _
    // Predicated region
    $region14: #{tpu_custom_call.1} parent=1 // pred_check
      _
    $region15: #{tpu_custom_call.1} parent=1 // pred_check_branch
      %40 = sbr.rel (0) target = $region17
    $region16: #{tpu_custom_call.1} parent=1 // pred_region
      %42 = dma.done [#allocation5], 384
    $region17: #{tpu_custom_call.1} parent=1 // pred_fallthru
      _
    %v43 = vld [vmem:[#allocation2] sm:$0xff]
    %v44 = vlaneseq
    %v45 = vand.u32 %v44, 127
    %vm46 = vcmp.lt.s32.totalorder %v45, 0
    %v47 = vsub.s32 0, %v45
    %v48 = vsel %vm46, %v47, %v45
    %v49 = vshrl.u32 %v48, 4
    %v50 = vand.u32 %v48, 15
    %v51 = vsub.s32 0, %v50
    %v52 = vsel %vm46, %v51, %v50
    %vm53 = vcmp.ne.s32.totalorder %v52, 0
    %vm54 = vcmp.lt.s32.totalorder %v52, 0
    %vm55 = vmand %vm54, %vm53
    %v56 = vadd.s32 %v52, 16
    %v57 = vsel %vm55, %v56, %v52
    %vm58 = vcmp.ne.s32.totalorder %v57, 0
    %v59 = vsel %vm58, 1, 0
    %v60 = vcvt.s32.f32 %v59
    %vm61 = vcmp.ne.s32.totalorder %v57, 15
    %v62 = vsel %vm61, 1, 0
    %v63 = vcvt.s32.f32 %v62
    %64 = vrot.lane.b32.xlu0 %v43, 1
    %v65 = vpop.permute.xlu0 %64
    %v66 = vmul.f32 %v65, %v60
    %67 = vrot.lane.b32.xlu0 %v43, 127
    %v68 = vpop.permute.xlu0 %67
    %v69 = vmul.f32 %v68, %v63
    %s70 = scalar_lea.vmem [#allocation4], 8
    %v71 = vld [vmem:[%s70] sm:$0xff]
    %v72 = vld [vmem:[#allocation4] sm:$0xff]
    %vm73 = vcmask 64512
    %v75 = vsel %vm73, %v72, 0
    %77 = vmatpush.msra.mxu0 0.0
    %78 = vmatpush.msra.mxu0 0.0
    %79 = vmatpush.msra.mxu0 0.0
    %80 = vmatpush.msra.mxu0 0.0
    %81 = vmatpush.msra.mxu0 0.0
    %82 = vmatpush.msra.mxu0 0.0
    %83 = vmatpush.msra.mxu0 0.0
    %84 = vmatpush.msra.mxu0 0.0
    %85 = vmatpush.msra.mxu0 0.0
    %86 = vmatpush.msra.mxu0 0.0
    %87 = vmatpush.msra.mxu0 0.0
    %88 = vmatpush.msra.mxu0 0.0
    %89 = vmatpush.msra.mxu0 0.0
    %90 = vmatpush.msra.mxu0 0.0
    %91 = vmatpush.msra.mxu0 0.0
    %92 = vmatpush.msra.mxu0 %v66
    %93 = vmatmul.f32.gmra.mxu0 %v75
    %v94 = vpop.f32.mrf.mxu0
    %v95 = vadd.f32 0.0, %v94
    %96 = vdwg.mxu0
    %v98 = vsel %vm73, %v71, 0
    %100 = vmatpush.msra.mxu0 0.0
    %101 = vmatpush.msra.mxu0 0.0
    %102 = vmatpush.msra.mxu0 0.0
    %103 = vmatpush.msra.mxu0 0.0
    %104 = vmatpush.msra.mxu0 0.0
    %105 = vmatpush.msra.mxu0 0.0
    %106 = vmatpush.msra.mxu0 0.0
    %107 = vmatpush.msra.mxu0 0.0
    %108 = vmatpush.msra.mxu0 0.0
    %109 = vmatpush.msra.mxu0 0.0
    %110 = vmatpush.msra.mxu0 0.0
    %111 = vmatpush.msra.mxu0 0.0
    %112 = vmatpush.msra.mxu0 0.0
    %113 = vmatpush.msra.mxu0 0.0
    %114 = vmatpush.msra.mxu0 0.0
    %115 = vmatpush.msra.mxu0 %v43
    %116 = vmatmul.f32.gmra.mxu0 %v98
    %v117 = vpop.f32.mrf.mxu0
    %v118 = vadd.f32 %v95, %v117
    %119 = vdwg.mxu0
    %s120 = scalar_lea.vmem [#allocation4], 16
    %v121 = vld [vmem:[%s120] sm:$0xff]
    %v123 = vsel %vm73, %v121, 0
    %125 = vmatpush.msra.mxu0 0.0
    %126 = vmatpush.msra.mxu0 0.0
    %127 = vmatpush.msra.mxu0 0.0
    %128 = vmatpush.msra.mxu0 0.0
    %129 = vmatpush.msra.mxu0 0.0
    %130 = vmatpush.msra.mxu0 0.0
    %131 = vmatpush.msra.mxu0 0.0
    %132 = vmatpush.msra.mxu0 0.0
    %133 = vmatpush.msra.mxu0 0.0
    %134 = vmatpush.msra.mxu0 0.0
    %135 = vmatpush.msra.mxu0 0.0
    %136 = vmatpush.msra.mxu0 0.0
    %137 = vmatpush.msra.mxu0 0.0
    %138 = vmatpush.msra.mxu0 0.0
    %139 = vmatpush.msra.mxu0 0.0
    %140 = vmatpush.msra.mxu0 %v69
    %141 = vmatmul.f32.gmra.mxu0 %v123
    %v142 = vpop.f32.mrf.mxu0
    %v143 = vadd.f32 0.0, %v142
    %144 = vdwg.mxu0
    %v145 = vadd.f32 %v118, %v143
    %146 = vadd.xlane.f32.xlu0 %v145
    %v147 = vpop.xlane.xlu0 %146
    %vm148 = vcmask 7168
    %149 = vst.msk [vmem:[%s2] sm:$0xff] %vm148, %v147
    %v150 = vmul.f32 %v145, %v145
    %151 = vadd.xlane.f32.xlu0 %v150
    %v152 = vpop.xlane.xlu0 %151
    %153 = vst.msk [vmem:[%s3] sm:$0xff] %vm148, %v152
    // Predicated region
    $region18: #{tpu_custom_call.1} parent=1 // pred_check
      _
    $region19: #{tpu_custom_call.1} parent=1 // pred_check_branch
      %155 = sbr.rel (0) target = $region21
    $region20: #{tpu_custom_call.1} parent=1 // pred_region
      _
    $region21: #{tpu_custom_call.1} parent=1 // pred_fallthru
      _
    // Predicated region
    $region22: #{tpu_custom_call.1} parent=1 // pred_check
      _
    $region23: #{tpu_custom_call.1} parent=1 // pred_check_branch
      %157 = sbr.rel (0) target = $region25
    $region24: #{tpu_custom_call.1} parent=1 // pred_region
      _
    $region25: #{tpu_custom_call.1} parent=1 // pred_fallthru
      _
    // Predicated region
    $region26: #{tpu_custom_call.1} parent=1 // pred_check
      _
    $region27: #{tpu_custom_call.1} parent=1 // pred_check_branch
      %159 = sbr.rel (0) target = $region29
    $region28: #{tpu_custom_call.1} parent=1 // pred_region
      _
    $region29: #{tpu_custom_call.1} parent=1 // pred_fallthru
      _
    // Predicated region
    $region30: #{tpu_custom_call.1} parent=1 // pred_check
      _
    $region31: #{tpu_custom_call.1} parent=1 // pred_check_branch
      %161 = sbr.rel (0) target = $region33
    $region32: #{tpu_custom_call.1} parent=1 // pred_region
      _
    $region33: #{tpu_custom_call.1} parent=1 // pred_fallthru
      _
    %162 = vsyncpa [#allocation3], 1
    %163 = vsyncpa [#allocation5], 1

</llo_original>
